<compile_context>
chip_gen: v5e
topology: v5e:2x2
jax: 0.10.0
libtpu: 0.0.40
codegen_flags: <defaults>
</compile_context>

<pallas_src>
import jax
import jax.numpy as jnp
from jax.experimental import pallas as pl
from jax.experimental.pallas import tpu as pltpu

_LANE = 128
_MIB = 1 << 20
_RESIDENT_BUDGET = 40 * _MIB    # conservative per-TC budget (v7x: 64 MiB physical)
_VMEM_LIMIT_CAP = 56 * _MIB


def _round_up(x, m):
    return ((x + m - 1) // m) * m


# -----------------------------------------------------------------------------
# Kernels
# -----------------------------------------------------------------------------

def _mlp_kernel_resident(x_ref, w1_ref, b1_ref, w2_ref, b2_ref, o_ref):
    # x_ref : (TB, n_in_p)     input dtype (bf16 cast done here, not in wrapper)
    # w1_ref: (n_in_p, hid_p)  bf16, pre-transposed, VMEM-resident across tiles
    # b1_ref: (1, hid_p)       f32
    # w2_ref: (hid_p, out_p)   bf16, pre-transposed, VMEM-resident
    # b2_ref: (1, out_p)       f32
    # o_ref : (TB, out_p)      bf16 (lane-dense, unmasked stores)
    x = x_ref[...].astype(jnp.bfloat16)
    h = jnp.dot(x, w1_ref[...], preferred_element_type=jnp.float32)
    h = jnp.maximum(h + b1_ref[...], 0.0)                     # f32 epilogue (VPU)
    y = jnp.dot(h.astype(jnp.bfloat16), w2_ref[...],
                preferred_element_type=jnp.float32)
    o_ref[...] = (y + b2_ref[...]).astype(o_ref.dtype)


def _mlp_kernel_ktiled(x_ref, w1_ref, b1_ref, w2_ref, b2_ref, o_ref, acc_ref):
    # grid = (batch_tiles, k_tiles); W1 is streamed over the reduction axis,
    # W2/biases stay resident, acc_ref is an f32 accumulator scratch.
    k = pl.program_id(1)

    @pl.when(k == 0)
    def _():
        acc_ref[...] = jnp.zeros_like(acc_ref)

    x = x_ref[...].astype(jnp.bfloat16)
    acc_ref[...] += jnp.dot(x, w1_ref[...], preferred_element_type=jnp.float32)

    @pl.when(k == pl.num_programs(1) - 1)
    def _():
        h = jnp.maximum(acc_ref[...] + b1_ref[...], 0.0).astype(jnp.bfloat16)
        y = jnp.dot(h, w2_ref[...], preferred_element_type=jnp.float32)
        o_ref[...] = (y + b2_ref[...]).astype(o_ref.dtype)


# -----------------------------------------------------------------------------
# One-time parameter preparation (hoisted out of the per-call hot path)
# -----------------------------------------------------------------------------

def prepare_mlp_params(w1, b1, w2, b2):
    """Transpose weights to MXU-native (K, N) layout, pad lane dims to 128 and
    W1's contraction dim to a 128 multiple, cast weights to bf16, biases to f32.

    Padded weight/bias entries MUST stay zero: padded hidden units evaluate to
    relu(0 + 0) = 0, and padded output columns (multiplied by zero W2 rows) are
    sliced off by the wrapper, so the padding is exact.
    """
    hid, n_in = w1.shape
    n_out, hid2 = w2.shape
    assert hid2 == hid, "W2 in_features must equal W1 out_features"
    n_in_p = _round_up(n_in, _LANE)
    hid_p = _round_up(hid, _LANE)
    n_out_p = _round_up(n_out, _LANE)

    w1t = jnp.zeros((n_in_p, hid_p), jnp.bfloat16).at[:n_in, :hid].set(
        jnp.asarray(w1, jnp.bfloat16).T)
    w2t = jnp.zeros((hid_p, n_out_p), jnp.bfloat16).at[:hid, :n_out].set(
        jnp.asarray(w2, jnp.bfloat16).T)
    b1p = jnp.zeros((1, hid_p), jnp.float32).at[0, :hid].set(
        jnp.asarray(b1, jnp.float32))
    b2p = jnp.zeros((1, n_out_p), jnp.float32).at[0, :n_out].set(
        jnp.asarray(b2, jnp.float32))
    return {"w1t": w1t, "b1": b1p, "w2t": w2t, "b2": b2p,
            "n_in": int(n_in), "hid": int(hid), "n_out": int(n_out)}


# -----------------------------------------------------------------------------
# Tiling plan
# -----------------------------------------------------------------------------

def _pick_batch_tile(B, cap):
    if B <= cap:
        return B        # single tile: block dim == full dim, zero padding/copy
    cands = [t for t in (512, 256, 128, 64, 32, 16) if t <= cap]
    for tb in cands:                       # largest tile with <= ~6% row waste
        if ((-B) % tb) * 16 <= B:
            return tb
    return min(cands, key=lambda t: (-B) % t)


def _plan(B, n_in_p, hid_p, n_out_p, x_itemsize, out_itemsize):
    w_res = 2 * (n_in_p * hid_p + hid_p * n_out_p) + 4 * (hid_p + n_out_p)

    def tile_bytes(tb, k):
        return (2 * tb * k * x_itemsize             # double-buffered X tiles
                + 2 * tb * n_out_p * out_itemsize   # double-buffered out tiles
                + tb * hid_p * 4 + tb * n_out_p * 4)  # f32 intermediates (slack)

    # Preferred: weights fully VMEM-resident, 1-D batch grid, big tiles.
    for cap in (512, 256, 128, 64):
        tb = _pick_batch_tile(B, cap)
        est = w_res + tile_bytes(tb, n_in_p)
        if est <= _RESIDENT_BUDGET:
            return {"mode": "resident", "tb": tb, "tk": n_in_p, "est": est}

    # Fallback for huge W1 (keeps v7x's per-TC VMEM honest): stream W1 over a
    # reduction grid axis with an f32 accumulator; W2/biases stay resident.
    tb = _pick_batch_tile(B, 256)
    w2_res = 2 * hid_p * n_out_p + 4 * (hid_p + n_out_p)
    for tk in (2048, 1024, 512, 256, 128):
        if n_in_p % tk:
            continue
        est = (w2_res + 2 * tk * hid_p * 2
               + 2 * tb * tk * x_itemsize
               + 2 * tb * n_out_p * out_itemsize
               + tb * hid_p * 4 + tb * n_out_p * 4)
        if est <= _RESIDENT_BUDGET:
            return {"mode": "ktiled", "tb": tb, "tk": tk, "est": est}
    # TODO(synk): layers so wide that even W2 / a single (tb, 128) K-slab blows
    # the budget would need an extra grid axis over hid / n_out.
    return {"mode": "ktiled", "tb": min(tb, 128), "tk": 128,
            "est": _RESIDENT_BUDGET}


# -----------------------------------------------------------------------------
# Forward
# -----------------------------------------------------------------------------

def mlp_forward(x_nchw, params, out_dtype=jnp.bfloat16,
                _force_mode=None, _force_tk=None, _force_tb=None):
    """Fused Flatten -> Linear -> ReLU -> Linear using prepared params."""
    w1t, b1, w2t, b2 = params["w1t"], params["b1"], params["w2t"], params["b2"]
    n_in, n_out = params["n_in"], params["n_out"]
    n_in_p, hid_p = w1t.shape
    n_out_p = w2t.shape[1]

    B = x_nchw.shape[0]
    x = x_nchw.reshape(B, -1)                  # torch.nn.Flatten (row-major)
    assert x.shape[1] == n_in, "flattened input width mismatch"

    plan = _plan(B, n_in_p, hid_p, n_out_p,
                 jnp.dtype(x.dtype).itemsize, jnp.dtype(out_dtype).itemsize)
    if _force_mode is not None:
        plan["mode"] = _force_mode
    if _force_tk is not None:
        plan["tk"] = _force_tk
    if _force_tb is not None:
        plan["tb"] = _force_tb
    tb, tk = plan["tb"], plan["tk"]

    B_p = _round_up(B, tb)
    if (B_p != B) or (n_in != n_in_p):
        # Only misaligned shapes pay this extra pass; the common case
        # (n_in % 128 == 0 and single/divisible batch tile) feeds x straight
        # through in its original dtype -- the bf16 cast happens in-kernel.
        xp = jnp.zeros((B_p, n_in_p), x.dtype).at[:B, :n_in].set(x)
    else:
        xp = x

    vmem_limit = int(min(_VMEM_LIMIT_CAP, max(32 * _MIB, plan["est"] + 8 * _MIB)))

    if plan["mode"] == "resident":
        out = pl.pallas_call(
            _mlp_kernel_resident,
            out_shape=jax.ShapeDtypeStruct((B_p, n_out_p), out_dtype),
            grid=(B_p // tb,),
            in_specs=[
                pl.BlockSpec((tb, n_in_p), lambda i: (i, 0)),       # X: batch-tiled
                pl.BlockSpec((n_in_p, hid_p), lambda i: (0, 0)),    # W1^T: resident
                pl.BlockSpec((1, hid_p), lambda i: (0, 0)),         # b1: resident
                pl.BlockSpec((hid_p, n_out_p), lambda i: (0, 0)),   # W2^T: resident
                pl.BlockSpec((1, n_out_p), lambda i: (0, 0)),       # b2: resident
            ],
            out_specs=pl.BlockSpec((tb, n_out_p), lambda i: (i, 0)),
            compiler_params=pltpu.CompilerParams(
                dimension_semantics=("parallel",),                  # megacore on v7x
                vmem_limit_bytes=vmem_limit),
        )(xp, w1t, b1, w2t, b2)
    else:
        out = pl.pallas_call(
            _mlp_kernel_ktiled,
            out_shape=jax.ShapeDtypeStruct((B_p, n_out_p), out_dtype),
            grid=(B_p // tb, n_in_p // tk),
            in_specs=[
                pl.BlockSpec((tb, tk), lambda i, k: (i, k)),        # X K-tiles
                pl.BlockSpec((tk, hid_p), lambda i, k: (k, 0)),     # W1^T streamed
                pl.BlockSpec((1, hid_p), lambda i, k: (0, 0)),
                pl.BlockSpec((hid_p, n_out_p), lambda i, k: (0, 0)),
                pl.BlockSpec((1, n_out_p), lambda i, k: (0, 0)),
            ],
            out_specs=pl.BlockSpec((tb, n_out_p), lambda i, k: (i, 0)),
            scratch_shapes=[pltpu.VMEM((tb, hid_p), jnp.float32)],
            compiler_params=pltpu.CompilerParams(
                dimension_semantics=("parallel", "arbitrary"),
                vmem_limit_bytes=vmem_limit),
        )(xp, w1t, b1, w2t, b2)

    # Slice off lane/batch padding (small bf16 slab; consumers that tolerate the
    # padded (B_p, n_out_p) buffer can take `out` directly and fuse this).
    return out[:B, :n_out]


# -----------------------------------------------------------------------------
# References & test
# -----------------------------------------------------------------------------

def _ref_forward_f32(x_nchw, w1, b1, w2, b2):
    x = x_nchw.reshape(x_nchw.shape[0], -1).astype(jnp.float32)
    h = jnp.maximum(x @ w1.T + b1, 0.0)
    return h @ w2.T + b2


def _ref_forward_bf16(x_nchw, w1, b1, w2, b2):
    # Same precision recipe as the kernel: bf16 operands, f32 accumulation.
    x = x_nchw.reshape(x_nchw.shape[0], -1).astype(jnp.bfloat16)
    h = jnp.dot(x, jnp.asarray(w1, jnp.bfloat16).T,
                preferred_element_type=jnp.float32)
    h = jnp.maximum(h + jnp.asarray(b1, jnp.float32), 0.0)
    y = jnp.dot(h.astype(jnp.bfloat16), jnp.asarray(w2, jnp.bfloat16).T,
                preferred_element_type=jnp.float32)
    return y + jnp.asarray(b2, jnp.float32)


if __name__ == "__main__":
    # Flatten of (B, C, H, W) => n_inputs = C*H*W; n_outputs = 32 => hidden = 64.
    B, C, H, W = 2, 4, 16, 16
    n_inputs = C * H * W          # 1024
    n_outputs = 32
    hidden = n_outputs * 2        # 64

    key = jax.random.PRNGKey(0)
    kx, k1, k2, k3, k4 = jax.random.split(key, 5)
    x = jax.random.normal(kx, (B, C, H, W), dtype=jnp.float32)

    bound1 = 1.0 / (n_inputs ** 0.5)
    w1 = jax.random.uniform(k1, (hidden, n_inputs), jnp.float32, -bound1, bound1)
    b1 = jax.random.uniform(k2, (hidden,), jnp.float32, -bound1, bound1)
    bound2 = 1.0 / (hidden ** 0.5)
    w2 = jax.random.uniform(k3, (n_outputs, hidden), jnp.float32, -bound2, bound2)
    b2 = jax.random.uniform(k4, (n_outputs,), jnp.float32, -bound2, bound2)

    # One-time weight prep (hoisted out of the per-forward hot path).
    params = prepare_mlp_params(w1, b1, w2, b2)
    jax.block_until_ready(params["w1t"])

    # Fast path: resident weights, x fed straight through (no pad/cast pass).
    y = mlp_forward(x, params)
    jax.block_until_ready(y)
    assert y.shape == (B, n_outputs)

    y32 = y.astype(jnp.float32)
    y_bf_ref = _ref_forward_bf16(x, w1, b1, w2, b2)
    y_f32_ref = _ref_forward_f32(x, w1, b1, w2, b2)
    # Tight check vs same-precision (bf16 operands, f32 accum) reference;
    # tolerance covers the final bf16 output rounding.
    assert jnp.allclose(y32, y_bf_ref, atol=2e-2, rtol=2e-2), \
        "mismatch vs bf16-precision reference"
    # Loose check vs full-f32 module semantics (bf16 numerics tradeoff).
    assert jnp.allclose(y32, y_f32_ref, atol=6e-2, rtol=6e-2), \
        "mismatch vs f32 reference"

    # Exercise the K-tiled fallback (auto-selected when W1 would blow the
    # per-TC VMEM budget, e.g. very wide layers on v7x).
    y_kt = mlp_forward(x, params, _force_mode="ktiled", _force_tk=128)
    jax.block_until_ready(y_kt)
    assert jnp.allclose(y_kt.astype(jnp.float32), y_bf_ref, atol=2e-2, rtol=2e-2), \
        "k-tiled path mismatch vs bf16-precision reference"

    print("KERNEL_OK")
</pallas_src>

<mosaic_0001>
module attributes {stable_mosaic.version = 11 : i64} {
  func.func @_mlp_kernel_resident(%arg0: i32, %arg1: memref<2x1024xf32, #tpu.memory_space<vmem>>, %arg2: memref<1024x128xbf16, #tpu.memory_space<vmem>>, %arg3: memref<1x128xf32, #tpu.memory_space<vmem>>, %arg4: memref<128x128xbf16, #tpu.memory_space<vmem>>, %arg5: memref<1x128xf32, #tpu.memory_space<vmem>>, %arg6: memref<2x128xbf16, #tpu.memory_space<vmem>>) attributes {dimension_semantics = [#tpu.dimension_semantics<parallel>], iteration_bounds = array<i64: 1>, scalar_prefetch = 0 : i64, scratch_operands = 0 : i64, tpu.core_type = #tpu.core_type<tc>, window_params = [{transform_indices = @transform_0, window_bounds = array<i64: 2, 1024>}, {pipeline_mode = #tpu.pipeline_mode<synchronous>, transform_indices = @transform_1, window_bounds = array<i64: 1024, 128>}, {pipeline_mode = #tpu.pipeline_mode<synchronous>, transform_indices = @transform_2, window_bounds = array<i64: 1, 128>}, {pipeline_mode = #tpu.pipeline_mode<synchronous>, transform_indices = @transform_3, window_bounds = array<i64: 128, 128>}, {pipeline_mode = #tpu.pipeline_mode<synchronous>, transform_indices = @transform_4, window_bounds = array<i64: 1, 128>}, {transform_indices = @transform_5, window_bounds = array<i64: 2, 128>}]} {
    %c0 = arith.constant 0 : index
    %c0_0 = arith.constant 0 : index
    %0 = vector.load %arg1[%c0, %c0_0] : memref<2x1024xf32, #tpu.memory_space<vmem>>, vector<2x1024xf32>
    %1 = arith.truncf %0 : vector<2x1024xf32> to vector<2x1024xbf16>
    %c0_1 = arith.constant 0 : index
    %c0_2 = arith.constant 0 : index
    %2 = vector.load %arg2[%c0_1, %c0_2] : memref<1024x128xbf16, #tpu.memory_space<vmem>>, vector<1024x128xbf16>
    %cst = arith.constant dense<0.000000e+00> : vector<2x128xf32>
    %3 = tpu.matmul %1, %2, %cst {dimension_numbers = #tpu.dot_dimension_numbers<[1], [0], [0], [1], [0, 0, 1, 1], [], []>} : vector<2x1024xbf16>, vector<1024x128xbf16>, vector<2x128xf32> -> vector<2x128xf32>
    %c0_3 = arith.constant 0 : index
    %c0_4 = arith.constant 0 : index
    %4 = vector.load %arg3[%c0_3, %c0_4] : memref<1x128xf32, #tpu.memory_space<vmem>>, vector<1x128xf32>
    %5 = vector.broadcast %4 : vector<1x128xf32> to vector<2x128xf32>
    %6 = arith.addf %3, %5 : vector<2x128xf32>
    %cst_5 = arith.constant 0.000000e+00 : f32
    %7 = vector.broadcast %cst_5 : f32 to vector<2x128xf32>
    %8 = arith.maximumf %6, %7 : vector<2x128xf32>
    %9 = arith.truncf %8 : vector<2x128xf32> to vector<2x128xbf16>
    %c0_6 = arith.constant 0 : index
    %c0_7 = arith.constant 0 : index
    %10 = vector.load %arg4[%c0_6, %c0_7] : memref<128x128xbf16, #tpu.memory_space<vmem>>, vector<128x128xbf16>
    %cst_8 = arith.constant dense<0.000000e+00> : vector<2x128xf32>
    %11 = tpu.matmul %9, %10, %cst_8 {dimension_numbers = #tpu.dot_dimension_numbers<[1], [0], [0], [1], [0, 0, 1, 1], [], []>} : vector<2x128xbf16>, vector<128x128xbf16>, vector<2x128xf32> -> vector<2x128xf32>
    %c0_9 = arith.constant 0 : index
    %c0_10 = arith.constant 0 : index
    %12 = vector.load %arg5[%c0_9, %c0_10] : memref<1x128xf32, #tpu.memory_space<vmem>>, vector<1x128xf32>
    %13 = vector.broadcast %12 : vector<1x128xf32> to vector<2x128xf32>
    %14 = arith.addf %11, %13 : vector<2x128xf32>
    %15 = arith.truncf %14 : vector<2x128xf32> to vector<2x128xbf16>
    %c0_11 = arith.constant 0 : index
    %c0_12 = arith.constant 0 : index
    %16 = vector.load %arg6[%c0_11, %c0_12] : memref<2x128xbf16, #tpu.memory_space<vmem>>, vector<2x128xbf16>
    tpu.vector_store %arg6[%c0_11, %c0_12], %15 {strides = array<i32>} : memref<2x128xbf16, #tpu.memory_space<vmem>>, vector<2x128xbf16>,
    return
  }
  func.func @transform_0(%arg0: i32) -> (i32, i32) {
    %c0_i32 = arith.constant 0 : i32
    %c0_i32_0 = arith.constant 0 : i32
    return %arg0, %c0_i32 : i32, i32
  }
  func.func @transform_1(%arg0: i32) -> (i32, i32) {
    %c0_i32 = arith.constant 0 : i32
    %c0_i32_0 = arith.constant 0 : i32
    %c0_i32_1 = arith.constant 0 : i32
    return %c0_i32, %c0_i32_0 : i32, i32
  }
  func.func @transform_2(%arg0: i32) -> (i32, i32) {
    %c0_i32 = arith.constant 0 : i32
    %c0_i32_0 = arith.constant 0 : i32
    %c0_i32_1 = arith.constant 0 : i32
    return %c0_i32, %c0_i32_0 : i32, i32
  }
  func.func @transform_3(%arg0: i32) -> (i32, i32) {
    %c0_i32 = arith.constant 0 : i32
    %c0_i32_0 = arith.constant 0 : i32
    %c0_i32_1 = arith.constant 0 : i32
    return %c0_i32, %c0_i32_0 : i32, i32
  }
  func.func @transform_4(%arg0: i32) -> (i32, i32) {
    %c0_i32 = arith.constant 0 : i32
    %c0_i32_0 = arith.constant 0 : i32
    %c0_i32_1 = arith.constant 0 : i32
    return %c0_i32, %c0_i32_0 : i32, i32
  }
  func.func @transform_5(%arg0: i32) -> (i32, i32) {
    %c0_i32 = arith.constant 0 : i32
    %c0_i32_0 = arith.constant 0 : i32
    return %arg0, %c0_i32 : i32, i32
  }
}

</mosaic_0001>

<llo_original>
// kernel: tpu_custom_call.1
$region0: #{tpu_custom_call.1}
  #allocation0 [shape = 'u32[]', space=smem, size = 0x4, offset = 0x4, fixed_abs, tag = 'smem constant byte address 0x4 - core index']
  #allocation1 [shape = 'u32[72,128]{1,0:T(1,128)}', space=vmem, size = 0x9000, scoped, tag = 'internal scratch']
  %s0 = inlined_call_operand.hbm [shape: f32[2,1024], index: 0, kind: input, shape index: {}]
  %s1 = inlined_call_operand.hbm [shape: bf16[1024,128], index: 1, kind: input, shape index: {}]
  %s2 = inlined_call_operand.vmem [shape: f32[1,128], index: 2, kind: input, shape index: {}]
  %s3 = inlined_call_operand.hbm [shape: bf16[128,128], index: 3, kind: input, shape index: {}]
  %s4 = inlined_call_operand.vmem [shape: f32[1,128], index: 4, kind: input, shape index: {}]
  %s5 = inlined_call_operand.hbm [shape: bf16[2,128], index: 5, kind: output, shape index: {}]
  %s6 = sld [smem:[#allocation0]]
  $region42: #{tpu_custom_call.1} parent=0
    _
  %s8 = ssub.s32 1, %s6
  %s9 = scalar_select 0, %s8, %s6
  $region1: #{tpu_custom_call.1} parent=0
    #allocation2 [shape = 'u8[8192]{0}', space=vmem, size = 0x2000, scoped, tag = 'input window, operand 0, single buffered']
    #allocation3 [shape = 's32[1]{0}', space=sflag, size = 0x4, scoped, tag = 'scoped memory for tpu_custom_call.1']
    #allocation4 [shape = 's32[1]{0}', space=sflag, size = 0x4, scoped, tag = 'scoped memory for tpu_custom_call.1']
    #allocation5 [shape = 'u8[262144]{0}', space=vmem, size = 0x40000, scoped, tag = 'input window, operand 1, single buffered']
    #allocation6 [shape = 's32[1]{0}', space=sflag, size = 0x4, scoped, tag = 'scoped memory for tpu_custom_call.1']
    #allocation7 [shape = 'u8[32768]{0}', space=vmem, size = 0x8000, scoped, tag = 'input window, operand 3, single buffered']
    #allocation8 [shape = 'u8[512]{0}', space=vmem, size = 0x400, scoped, tag = 'output window, operand 0, single buffered']
    %10 = vsyncpa [#allocation3], 0
    %11 = vsyncpa [#allocation6], 0
    %12 = vsyncpa [#allocation4], 0
    // Predicated region
    $region2: #{tpu_custom_call.1} parent=1 // pred_check
      _
    $region3: #{tpu_custom_call.1} parent=1 // pred_check_branch
      %14 = sbr.rel (0) target = $region5
    $region4: #{tpu_custom_call.1} parent=1 // pred_region
      %16 = vsyncadd [#allocation3], 0
      %s18 = sshll.u32 %s0, 4
      %s19 = int_to_ptr.hbm [resolvable:$true] %s18
      %s20 = sshll.u32 [#allocation2], 4
      %s21 = int_to_ptr.vmem [resolvable:$true] %s20
      %23 = dma.hbm_to_vmem [thread:$0]  %s19, 256, %s21, [#allocation3]
    $region5: #{tpu_custom_call.1} parent=1 // pred_fallthru
      _
    // Predicated region
    $region6: #{tpu_custom_call.1} parent=1 // pred_check
      _
    $region7: #{tpu_custom_call.1} parent=1 // pred_check_branch
      %25 = sbr.rel (0) target = $region9
    $region8: #{tpu_custom_call.1} parent=1 // pred_region
      %27 = vsyncadd [#allocation6], 0
      %s28 = sshll.u32 %s1, 4
      %s29 = int_to_ptr.hbm [resolvable:$true] %s28
      %s30 = sshll.u32 [#allocation5], 4
      %s31 = int_to_ptr.vmem [resolvable:$true] %s30
      %36 = dma.hbm_to_vmem [thread:$0]  %s29, 8192, %s31, [#allocation6], 64, 64, 4
    $region9: #{tpu_custom_call.1} parent=1 // pred_fallthru
      _
    // Predicated region
    $region10: #{tpu_custom_call.1} parent=1 // pred_check
      _
    $region11: #{tpu_custom_call.1} parent=1 // pred_check_branch
      %38 = sbr.rel (0) target = $region13
    $region12: #{tpu_custom_call.1} parent=1 // pred_region
      _
    $region13: #{tpu_custom_call.1} parent=1 // pred_fallthru
      _
    // Predicated region
    $region14: #{tpu_custom_call.1} parent=1 // pred_check
      _
    $region15: #{tpu_custom_call.1} parent=1 // pred_check_branch
      %40 = sbr.rel (0) target = $region17
    $region16: #{tpu_custom_call.1} parent=1 // pred_region
      %42 = vsyncadd [#allocation6], 0
      %s43 = sshll.u32 %s3, 4
      %s44 = int_to_ptr.hbm [resolvable:$true] %s43
      %s45 = sshll.u32 [#allocation7], 4
      %s46 = int_to_ptr.vmem [resolvable:$true] %s45
      %51 = dma.hbm_to_vmem [thread:$0]  %s44, 1024, %s46, [#allocation6], 64, 64, 4
    $region17: #{tpu_custom_call.1} parent=1 // pred_fallthru
      _
    // Predicated region
    $region18: #{tpu_custom_call.1} parent=1 // pred_check
      _
    $region19: #{tpu_custom_call.1} parent=1 // pred_check_branch
      %53 = sbr.rel (0) target = $region21
    $region20: #{tpu_custom_call.1} parent=1 // pred_region
      _
    $region21: #{tpu_custom_call.1} parent=1 // pred_fallthru
      _
    // Predicated region
    $region22: #{tpu_custom_call.1} parent=1 // pred_check
      _
    $region23: #{tpu_custom_call.1} parent=1 // pred_check_branch
      %55 = sbr.rel (0) target = $region25
    $region24: #{tpu_custom_call.1} parent=1 // pred_region
      %57 = dma.done [#allocation3], 256
    $region25: #{tpu_custom_call.1} parent=1 // pred_fallthru
      _
    // Predicated region
    $region26: #{tpu_custom_call.1} parent=1 // pred_check
      _
    $region27: #{tpu_custom_call.1} parent=1 // pred_check_branch
      %59 = sbr.rel (0) target = $region29
    $region28: #{tpu_custom_call.1} parent=1 // pred_region
      %61 = dma.done [#allocation6], 8192
    $region29: #{tpu_custom_call.1} parent=1 // pred_fallthru
      _
    // Predicated region
    $region30: #{tpu_custom_call.1} parent=1 // pred_check
      _
    $region31: #{tpu_custom_call.1} parent=1 // pred_check_branch
      %63 = sbr.rel (0) target = $region33
    $region32: #{tpu_custom_call.1} parent=1 // pred_region
      %65 = dma.done [#allocation6], 1024
    $region33: #{tpu_custom_call.1} parent=1 // pred_fallthru
      _
    %v66 = vld [vmem:[#allocation2] sm:$0xff]
    %v67 = vld [vmem:[#allocation2 + $0x8] sm:$0xff]
    %70 = vst [vmem:[#allocation1] ss:$4 sm:$0xff] %v66
    %s71 = scalar_lea.vmem [#allocation1], 32
    %72 = vst [vmem:[%s71] ss:$4 sm:$0xff] %v67
    %v73 = vld.sshfl [vmem:[#allocation1] sm:$0xff pattern:$0x73625140]
    %v74 = vld.sshfl [vmem:[#allocation1 + $0x8] sm:$0xff pattern:$0x73625140]
    %v75 = vld.sshfl [vmem:[#allocation1 + $0x10] sm:$0xff pattern:$0x73625140]
    %v76 = vld.sshfl [vmem:[#allocation1 + $0x18] sm:$0xff pattern:$0x73625140]
    %v77 = vld.sshfl [vmem:[#allocation1 + $0x20] sm:$0xff pattern:$0x73625140]
    %v78 = vld.sshfl [vmem:[#allocation1 + $0x28] sm:$0xff pattern:$0x73625140]
    %v79 = vld.sshfl [vmem:[#allocation1 + $0x30] sm:$0xff pattern:$0x73625140]
    %v80 = vld.sshfl [vmem:[#allocation1 + $0x38] sm:$0xff pattern:$0x73625140]
    %v89 = vpack.c.bf16 %v73, %v73
    %v90 = vpack.c.bf16 %v74, %v74
    %v91 = vpack.c.bf16 %v75, %v75
    %v92 = vpack.c.bf16 %v76, %v76
    %v93 = vpack.c.bf16 %v77, %v77
    %v94 = vpack.c.bf16 %v78, %v78
    %v95 = vpack.c.bf16 %v79, %v79
    %v96 = vpack.c.bf16 %v80, %v80
    %v97 = vld [vmem:[#allocation5] sm:$0xf]
    %v98 = vld [vmem:[#allocation5 + $0x4] sm:$0xf]
    %v99 = vld [vmem:[#allocation5 + $0x8] sm:$0xf]
    %v100 = vld [vmem:[#allocation5 + $0xc] sm:$0xf]
    %v101 = vld [vmem:[#allocation5 + $0x10] sm:$0xf]
    %v102 = vld [vmem:[#allocation5 + $0x14] sm:$0xf]
    %v103 = vld [vmem:[#allocation5 + $0x18] sm:$0xf]
    %v104 = vld [vmem:[#allocation5 + $0x1c] sm:$0xf]
    %v105 = vld [vmem:[#allocation5 + $0x20] sm:$0xf]
    %v106 = vld [vmem:[#allocation5 + $0x24] sm:$0xf]
    %v107 = vld [vmem:[#allocation5 + $0x28] sm:$0xf]
    %v108 = vld [vmem:[#allocation5 + $0x2c] sm:$0xf]
    %v109 = vld [vmem:[#allocation5 + $0x30] sm:$0xf]
    %v110 = vld [vmem:[#allocation5 + $0x34] sm:$0xf]
    %v111 = vld [vmem:[#allocation5 + $0x38] sm:$0xf]
    %v112 = vld [vmem:[#allocation5 + $0x3c] sm:$0xf]
    %v113 = vld [vmem:[#allocation5 + $0x40] sm:$0xf]
    %v114 = vld [vmem:[#allocation5 + $0x44] sm:$0xf]
    %v115 = vld [vmem:[#allocation5 + $0x48] sm:$0xf]
    %v116 = vld [vmem:[#allocation5 + $0x4c] sm:$0xf]
    %v117 = vld [vmem:[#allocation5 + $0x50] sm:$0xf]
    %v118 = vld [vmem:[#allocation5 + $0x54] sm:$0xf]
    %v119 = vld [vmem:[#allocation5 + $0x58] sm:$0xf]
    %v120 = vld [vmem:[#allocation5 + $0x5c] sm:$0xf]
    %v121 = vld [vmem:[#allocation5 + $0x60] sm:$0xf]
    %v122 = vld [vmem:[#allocation5 + $0x64] sm:$0xf]
    %v123 = vld [vmem:[#allocation5 + $0x68] sm:$0xf]
    %v124 = vld [vmem:[#allocation5 + $0x6c] sm:$0xf]
    %v125 = vld [vmem:[#allocation5 + $0x70] sm:$0xf]
    %v126 = vld [vmem:[#allocation5 + $0x74] sm:$0xf]
    %v127 = vld [vmem:[#allocation5 + $0x78] sm:$0xf]
    %v128 = vld [vmem:[#allocation5 + $0x7c] sm:$0xf]
    %v129 = vld [vmem:[#allocation5 + $0x80] sm:$0xf]
    %v130 = vld [vmem:[#allocation5 + $0x84] sm:$0xf]
    %v131 = vld [vmem:[#allocation5 + $0x88] sm:$0xf]
    %v132 = vld [vmem:[#allocation5 + $0x8c] sm:$0xf]
    %v133 = vld [vmem:[#allocation5 + $0x90] sm:$0xf]
    %v134 = vld [vmem:[#allocation5 + $0x94] sm:$0xf]
    %v135 = vld [vmem:[#allocation5 + $0x98] sm:$0xf]
    %v136 = vld [vmem:[#allocation5 + $0x9c] sm:$0xf]
    %v137 = vld [vmem:[#allocation5 + $0xa0] sm:$0xf]
    %v138 = vld [vmem:[#allocation5 + $0xa4] sm:$0xf]
    %v139 = vld [vmem:[#allocation5 + $0xa8] sm:$0xf]
    %v140 = vld [vmem:[#allocation5 + $0xac] sm:$0xf]
    %v141 = vld [vmem:[#allocation5 + $0xb0] sm:$0xf]
    %v142 = vld [vmem:[#allocation5 + $0xb4] sm:$0xf]
    %v143 = vld [vmem:[#allocation5 + $0xb8] sm:$0xf]
    %v144 = vld [vmem:[#allocation5 + $0xbc] sm:$0xf]
    %v145 = vld [vmem:[#allocation5 + $0xc0] sm:$0xf]
    %v146 = vld [vmem:[#allocation5 + $0xc4] sm:$0xf]
    %v147 = vld [vmem:[#allocation5 + $0xc8] sm:$0xf]
    %v148 = vld [vmem:[#allocation5 + $0xcc] sm:$0xf]
    %v149 = vld [vmem:[#allocation5 + $0xd0] sm:$0xf]
    %v150 = vld [vmem:[#allocation5 + $0xd4] sm:$0xf]
    %v151 = vld [vmem:[#allocation5 + $0xd8] sm:$0xf]
    %v152 = vld [vmem:[#allocation5 + $0xdc] sm:$0xf]
    %v153 = vld [vmem:[#allocation5 + $0xe0] sm:$0xf]
    %v154 = vld [vmem:[#allocation5 + $0xe4] sm:$0xf]
    %v155 = vld [vmem:[#allocation5 + $0xe8] sm:$0xf]
    %v156 = vld [vmem:[#allocation5 + $0xec] sm:$0xf]
    %v157 = vld [vmem:[#allocation5 + $0xf0] sm:$0xf]
    %v158 = vld [vmem:[#allocation5 + $0xf4] sm:$0xf]
    %v159 = vld [vmem:[#allocation5 + $0xf8] sm:$0xf]
    %v160 = vld [vmem:[#allocation5 + $0xfc] sm:$0xf]
    %v161 = vld [vmem:[#allocation5 + $0x100] sm:$0xf]
    %v162 = vld [vmem:[#allocation5 + $0x104] sm:$0xf]
    %v163 = vld [vmem:[#allocation5 + $0x108] sm:$0xf]
    %v164 = vld [vmem:[#allocation5 + $0x10c] sm:$0xf]
    %v165 = vld [vmem:[#allocation5 + $0x110] sm:$0xf]
    %v166 = vld [vmem:[#allocation5 + $0x114] sm:$0xf]
    %v167 = vld [vmem:[#allocation5 + $0x118] sm:$0xf]
    %v168 = vld [vmem:[#allocation5 + $0x11c] sm:$0xf]
    %v169 = vld [vmem:[#allocation5 + $0x120] sm:$0xf]
    %v170 = vld [vmem:[#allocation5 + $0x124] sm:$0xf]
    %v171 = vld [vmem:[#allocation5 + $0x128] sm:$0xf]
    %v172 = vld [vmem:[#allocation5 + $0x12c] sm:$0xf]
    %v173 = vld [vmem:[#allocation5 + $0x130] sm:$0xf]
    %v174 = vld [vmem:[#allocation5 + $0x134] sm:$0xf]
    %v175 = vld [vmem:[#allocation5 + $0x138] sm:$0xf]
    %v176 = vld [vmem:[#allocation5 + $0x13c] sm:$0xf]
    %v177 = vld [vmem:[#allocation5 + $0x140] sm:$0xf]
    %v178 = vld [vmem:[#allocation5 + $0x144] sm:$0xf]
    %v179 = vld [vmem:[#allocation5 + $0x148] sm:$0xf]
    %v180 = vld [vmem:[#allocation5 + $0x14c] sm:$0xf]
    %v181 = vld [vmem:[#allocation5 + $0x150] sm:$0xf]
    %v182 = vld [vmem:[#allocation5 + $0x154] sm:$0xf]
    %v183 = vld [vmem:[#allocation5 + $0x158] sm:$0xf]
    %v184 = vld [vmem:[#allocation5 + $0x15c] sm:$0xf]
    %v185 = vld [vmem:[#allocation5 + $0x160] sm:$0xf]
    %v186 = vld [vmem:[#allocation5 + $0x164] sm:$0xf]
    %v187 = vld [vmem:[#allocation5 + $0x168] sm:$0xf]
    %v188 = vld [vmem:[#allocation5 + $0x16c] sm:$0xf]
    %v189 = vld [vmem:[#allocation5 + $0x170] sm:$0xf]
    %v190 = vld [vmem:[#allocation5 + $0x174] sm:$0xf]
    %v191 = vld [vmem:[#allocation5 + $0x178] sm:$0xf]
    %v192 = vld [vmem:[#allocation5 + $0x17c] sm:$0xf]
    %v193 = vld [vmem:[#allocation5 + $0x180] sm:$0xf]
    %v194 = vld [vmem:[#allocation5 + $0x184] sm:$0xf]
    %v195 = vld [vmem:[#allocation5 + $0x188] sm:$0xf]
    %v196 = vld [vmem:[#allocation5 + $0x18c] sm:$0xf]
    %v197 = vld [vmem:[#allocation5 + $0x190] sm:$0xf]
    %v198 = vld [vmem:[#allocation5 + $0x194] sm:$0xf]
    %v199 = vld [vmem:[#allocation5 + $0x198] sm:$0xf]
    %v200 = vld [vmem:[#allocation5 + $0x19c] sm:$0xf]
    %v201 = vld [vmem:[#allocation5 + $0x1a0] sm:$0xf]
    %v202 = vld [vmem:[#allocation5 + $0x1a4] sm:$0xf]
    %v203 = vld [vmem:[#allocation5 + $0x1a8] sm:$0xf]
    %v204 = vld [vmem:[#allocation5 + $0x1ac] sm:$0xf]
    %v205 = vld [vmem:[#allocation5 + $0x1b0] sm:$0xf]
    %v206 = vld [vmem:[#allocation5 + $0x1b4] sm:$0xf]
    %v207 = vld [vmem:[#allocation5 + $0x1b8] sm:$0xf]
    %v208 = vld [vmem:[#allocation5 + $0x1bc] sm:$0xf]
    %v209 = vld [vmem:[#allocation5 + $0x1c0] sm:$0xf]
    %v210 = vld [vmem:[#allocation5 + $0x1c4] sm:$0xf]
    %v211 = vld [vmem:[#allocation5 + $0x1c8] sm:$0xf]
    %v212 = vld [vmem:[#allocation5 + $0x1cc] sm:$0xf]
    %v213 = vld [vmem:[#allocation5 + $0x1d0] sm:$0xf]
    %v214 = vld [vmem:[#allocation5 + $0x1d4] sm:$0xf]
    %v215 = vld [vmem:[#allocation5 + $0x1d8] sm:$0xf]
    %v216 = vld [vmem:[#allocation5 + $0x1dc] sm:$0xf]
    %v217 = vld [vmem:[#allocation5 + $0x1e0] sm:$0xf]
    %v218 = vld [vmem:[#allocation5 + $0x1e4] sm:$0xf]
    %v219 = vld [vmem:[#allocation5 + $0x1e8] sm:$0xf]
    %v220 = vld [vmem:[#allocation5 + $0x1ec] sm:$0xf]
    %v221 = vld [vmem:[#allocation5 + $0x1f0] sm:$0xf]
    %v222 = vld [vmem:[#allocation5 + $0x1f4] sm:$0xf]
    %v223 = vld [vmem:[#allocation5 + $0x1f8] sm:$0xf]
    %v224 = vld [vmem:[#allocation5 + $0x1fc] sm:$0xf]
    %v225 = vld [vmem:[%s2] sm:$0x1]
    %v227 = vperm.slane %v225, 0
    %v357 = vunpack.c.l.b16 %v97
    %v358 = vunpack.c.l.b16 %v98
    %v359 = vunpack.c.l.b16 %v99
    %v360 = vunpack.c.l.b16 %v100
    %v361 = vunpack.c.l.b16 %v101
    %v362 = vunpack.c.l.b16 %v102
    %v363 = vunpack.c.l.b16 %v103
    %v364 = vunpack.c.l.b16 %v104
    %v365 = vunpack.c.l.b16 %v105
    %v366 = vunpack.c.l.b16 %v106
    %v367 = vunpack.c.l.b16 %v107
    %v368 = vunpack.c.l.b16 %v108
    %v369 = vunpack.c.l.b16 %v109
    %v370 = vunpack.c.l.b16 %v110
    %v371 = vunpack.c.l.b16 %v111
    %v372 = vunpack.c.l.b16 %v112
    %v373 = vunpack.c.l.b16 %v113
    %v374 = vunpack.c.l.b16 %v114
    %v375 = vunpack.c.l.b16 %v115
    %v376 = vunpack.c.l.b16 %v116
    %v377 = vunpack.c.l.b16 %v117
    %v378 = vunpack.c.l.b16 %v118
    %v379 = vunpack.c.l.b16 %v119
    %v380 = vunpack.c.l.b16 %v120
    %v381 = vunpack.c.l.b16 %v121
    %v382 = vunpack.c.l.b16 %v122
    %v383 = vunpack.c.l.b16 %v123
    %v384 = vunpack.c.l.b16 %v124
    %v385 = vunpack.c.l.b16 %v125
    %v386 = vunpack.c.l.b16 %v126
    %v387 = vunpack.c.l.b16 %v127
    %v388 = vunpack.c.l.b16 %v128
    %v389 = vunpack.c.l.b16 %v129
    %v390 = vunpack.c.l.b16 %v130
    %v391 = vunpack.c.l.b16 %v131
    %v392 = vunpack.c.l.b16 %v132
    %v393 = vunpack.c.l.b16 %v133
    %v394 = vunpack.c.l.b16 %v134
    %v395 = vunpack.c.l.b16 %v135
    %v396 = vunpack.c.l.b16 %v136
    %v397 = vunpack.c.l.b16 %v137
    %v398 = vunpack.c.l.b16 %v138
    %v399 = vunpack.c.l.b16 %v139
    %v400 = vunpack.c.l.b16 %v140
    %v401 = vunpack.c.l.b16 %v141
    %v402 = vunpack.c.l.b16 %v142
    %v403 = vunpack.c.l.b16 %v143
    %v404 = vunpack.c.l.b16 %v144
    %v405 = vunpack.c.l.b16 %v145
    %v406 = vunpack.c.l.b16 %v146
    %v407 = vunpack.c.l.b16 %v147
    %v408 = vunpack.c.l.b16 %v148
    %v409 = vunpack.c.l.b16 %v149
    %v410 = vunpack.c.l.b16 %v150
    %v411 = vunpack.c.l.b16 %v151
    %v412 = vunpack.c.l.b16 %v152
    %v413 = vunpack.c.l.b16 %v153
    %v414 = vunpack.c.l.b16 %v154
    %v415 = vunpack.c.l.b16 %v155
    %v416 = vunpack.c.l.b16 %v156
    %v417 = vunpack.c.l.b16 %v157
    %v418 = vunpack.c.l.b16 %v158
    %v419 = vunpack.c.l.b16 %v159
    %v420 = vunpack.c.l.b16 %v160
    %v421 = vunpack.c.l.b16 %v161
    %v422 = vunpack.c.l.b16 %v162
    %v423 = vunpack.c.l.b16 %v163
    %v424 = vunpack.c.l.b16 %v164
    %v425 = vunpack.c.l.b16 %v165
    %v426 = vunpack.c.l.b16 %v166
    %v427 = vunpack.c.l.b16 %v167
    %v428 = vunpack.c.l.b16 %v168
    %v429 = vunpack.c.l.b16 %v169
    %v430 = vunpack.c.l.b16 %v170
    %v431 = vunpack.c.l.b16 %v171
    %v432 = vunpack.c.l.b16 %v172
    %v433 = vunpack.c.l.b16 %v173
    %v434 = vunpack.c.l.b16 %v174
    %v435 = vunpack.c.l.b16 %v175
    %v436 = vunpack.c.l.b16 %v176
    %v437 = vunpack.c.l.b16 %v177
    %v438 = vunpack.c.l.b16 %v178
    %v439 = vunpack.c.l.b16 %v179
    %v440 = vunpack.c.l.b16 %v180
    %v441 = vunpack.c.l.b16 %v181
    %v442 = vunpack.c.l.b16 %v182
    %v443 = vunpack.c.l.b16 %v183
    %v444 = vunpack.c.l.b16 %v184
    %v445 = vunpack.c.l.b16 %v185
    %v446 = vunpack.c.l.b16 %v186
    %v447 = vunpack.c.l.b16 %v187
    %v448 = vunpack.c.l.b16 %v188
    %v449 = vunpack.c.l.b16 %v189
    %v450 = vunpack.c.l.b16 %v190
    %v451 = vunpack.c.l.b16 %v191
    %v452 = vunpack.c.l.b16 %v192
    %v453 = vunpack.c.l.b16 %v193
    %v454 = vunpack.c.l.b16 %v194
    %v455 = vunpack.c.l.b16 %v195
    %v456 = vunpack.c.l.b16 %v196
    %v457 = vunpack.c.l.b16 %v197
    %v458 = vunpack.c.l.b16 %v198
    %v459 = vunpack.c.l.b16 %v199
    %v460 = vunpack.c.l.b16 %v200
    %v461 = vunpack.c.l.b16 %v201
    %v462 = vunpack.c.l.b16 %v202
    %v463 = vunpack.c.l.b16 %v203
    %v464 = vunpack.c.l.b16 %v204
    %v465 = vunpack.c.l.b16 %v205
    %v466 = vunpack.c.l.b16 %v206
    %v467 = vunpack.c.l.b16 %v207
    %v468 = vunpack.c.l.b16 %v208
    %v469 = vunpack.c.l.b16 %v209
    %v470 = vunpack.c.l.b16 %v210
    %v471 = vunpack.c.l.b16 %v211
    %v472 = vunpack.c.l.b16 %v212
    %v473 = vunpack.c.l.b16 %v213
    %v474 = vunpack.c.l.b16 %v214
    %v475 = vunpack.c.l.b16 %v215
    %v476 = vunpack.c.l.b16 %v216
    %v477 = vunpack.c.l.b16 %v217
    %v478 = vunpack.c.l.b16 %v218
    %v479 = vunpack.c.l.b16 %v219
    %v480 = vunpack.c.l.b16 %v220
    %v481 = vunpack.c.l.b16 %v221
    %v482 = vunpack.c.l.b16 %v222
    %v483 = vunpack.c.l.b16 %v223
    %v484 = vunpack.c.l.b16 %v224
    %v485 = vpack.c.b16 %v358, %v357
    %v486 = vpack.c.b16 %v360, %v359
    %v487 = vpack.c.b16 %v362, %v361
    %v488 = vpack.c.b16 %v364, %v363
    %v489 = vpack.c.b16 %v366, %v365
    %v490 = vpack.c.b16 %v368, %v367
    %v491 = vpack.c.b16 %v370, %v369
    %v492 = vpack.c.b16 %v372, %v371
    %v493 = vpack.c.b16 %v374, %v373
    %v494 = vpack.c.b16 %v376, %v375
    %v495 = vpack.c.b16 %v378, %v377
    %v496 = vpack.c.b16 %v380, %v379
    %v497 = vpack.c.b16 %v382, %v381
    %v498 = vpack.c.b16 %v384, %v383
    %v499 = vpack.c.b16 %v386, %v385
    %v500 = vpack.c.b16 %v388, %v387
    %v501 = vpack.c.b16 %v390, %v389
    %v502 = vpack.c.b16 %v392, %v391
    %v503 = vpack.c.b16 %v394, %v393
    %v504 = vpack.c.b16 %v396, %v395
    %v505 = vpack.c.b16 %v398, %v397
    %v506 = vpack.c.b16 %v400, %v399
    %v507 = vpack.c.b16 %v402, %v401
    %v508 = vpack.c.b16 %v404, %v403
    %v509 = vpack.c.b16 %v406, %v405
    %v510 = vpack.c.b16 %v408, %v407
    %v511 = vpack.c.b16 %v410, %v409
    %v512 = vpack.c.b16 %v412, %v411
    %v513 = vpack.c.b16 %v414, %v413
    %v514 = vpack.c.b16 %v416, %v415
    %v515 = vpack.c.b16 %v418, %v417
    %v516 = vpack.c.b16 %v420, %v419
    %v517 = vpack.c.b16 %v422, %v421
    %v518 = vpack.c.b16 %v424, %v423
    %v519 = vpack.c.b16 %v426, %v425
    %v520 = vpack.c.b16 %v428, %v427
    %v521 = vpack.c.b16 %v430, %v429
    %v522 = vpack.c.b16 %v432, %v431
    %v523 = vpack.c.b16 %v434, %v433
    %v524 = vpack.c.b16 %v436, %v435
    %v525 = vpack.c.b16 %v438, %v437
    %v526 = vpack.c.b16 %v440, %v439
    %v527 = vpack.c.b16 %v442, %v441
    %v528 = vpack.c.b16 %v444, %v443
    %v529 = vpack.c.b16 %v446, %v445
    %v530 = vpack.c.b16 %v448, %v447
    %v531 = vpack.c.b16 %v450, %v449
    %v532 = vpack.c.b16 %v452, %v451
    %v533 = vpack.c.b16 %v454, %v453
    %v534 = vpack.c.b16 %v456, %v455
    %v535 = vpack.c.b16 %v458, %v457
    %v536 = vpack.c.b16 %v460, %v459
    %v537 = vpack.c.b16 %v462, %v461
    %v538 = vpack.c.b16 %v464, %v463
    %v539 = vpack.c.b16 %v466, %v465
    %v540 = vpack.c.b16 %v468, %v467
    %v541 = vpack.c.b16 %v470, %v469
    %v542 = vpack.c.b16 %v472, %v471
    %v543 = vpack.c.b16 %v474, %v473
    %v544 = vpack.c.b16 %v476, %v475
    %v545 = vpack.c.b16 %v478, %v477
    %v546 = vpack.c.b16 %v480, %v479
    %v547 = vpack.c.b16 %v482, %v481
    %v548 = vpack.c.b16 %v484, %v483
    %613 = vmatpush.bf16.msra.mxu0 %v492
    %614 = vmatpush.bf16.msra.mxu0 %v491
    %615 = vmatpush.bf16.msra.mxu0 %v490
    %616 = vmatpush.bf16.msra.mxu0 %v489
    %617 = vmatpush.bf16.msra.mxu0 %v488
    %618 = vmatpush.bf16.msra.mxu0 %v487
    %619 = vmatpush.bf16.msra.mxu0 %v486
    %620 = vmatpush.bf16.msra.mxu0 %v485
    %621 = vmatmul.bf16.gmra.mxu0 %v89
    %v622 = vpop.f32.mrf.mxu0
    %v623 = vadd.f32 %v227, %v622
    %v624 = vpop.f32.mrf.mxu0
    %625 = vdwg.mxu0
    %626 = vmatpush.bf16.msra.mxu0 %v500
    %627 = vmatpush.bf16.msra.mxu0 %v499
    %628 = vmatpush.bf16.msra.mxu0 %v498
    %629 = vmatpush.bf16.msra.mxu0 %v497
    %630 = vmatpush.bf16.msra.mxu0 %v496
    %631 = vmatpush.bf16.msra.mxu0 %v495
    %632 = vmatpush.bf16.msra.mxu0 %v494
    %633 = vmatpush.bf16.msra.mxu0 %v493
    %634 = vmatmul.bf16.gmra.mxu0 %v90
    %v635 = vpop.f32.mrf.mxu0
    %v636 = vadd.f32 %v623, %v635
    %v637 = vpop.f32.mrf.mxu0
    %638 = vdwg.mxu0
    %639 = vmatpush.bf16.msra.mxu0 %v508
    %640 = vmatpush.bf16.msra.mxu0 %v507
    %641 = vmatpush.bf16.msra.mxu0 %v506
    %642 = vmatpush.bf16.msra.mxu0 %v505
    %643 = vmatpush.bf16.msra.mxu0 %v504
    %644 = vmatpush.bf16.msra.mxu0 %v503
    %645 = vmatpush.bf16.msra.mxu0 %v502
    %646 = vmatpush.bf16.msra.mxu0 %v501
    %647 = vmatmul.bf16.gmra.mxu0 %v91
    %v648 = vpop.f32.mrf.mxu0
    %v649 = vadd.f32 %v636, %v648
    %v650 = vpop.f32.mrf.mxu0
    %651 = vdwg.mxu0
    %652 = vmatpush.bf16.msra.mxu0 %v516
    %653 = vmatpush.bf16.msra.mxu0 %v515
    %654 = vmatpush.bf16.msra.mxu0 %v514
    %655 = vmatpush.bf16.msra.mxu0 %v513
    %656 = vmatpush.bf16.msra.mxu0 %v512
    %657 = vmatpush.bf16.msra.mxu0 %v511
    %658 = vmatpush.bf16.msra.mxu0 %v510
    %659 = vmatpush.bf16.msra.mxu0 %v509
    %660 = vmatmul.bf16.gmra.mxu0 %v92
    %v661 = vpop.f32.mrf.mxu0
    %v662 = vadd.f32 %v649, %v661
    %v663 = vpop.f32.mrf.mxu0
    %664 = vdwg.mxu0
    %665 = vmatpush.bf16.msra.mxu0 %v524
    %666 = vmatpush.bf16.msra.mxu0 %v523
    %667 = vmatpush.bf16.msra.mxu0 %v522
    %668 = vmatpush.bf16.msra.mxu0 %v521
    %669 = vmatpush.bf16.msra.mxu0 %v520
    %670 = vmatpush.bf16.msra.mxu0 %v519
    %671 = vmatpush.bf16.msra.mxu0 %v518
    %672 = vmatpush.bf16.msra.mxu0 %v517
    %673 = vmatmul.bf16.gmra.mxu0 %v93
    %v674 = vpop.f32.mrf.mxu0
    %v675 = vadd.f32 %v662, %v674
    %v676 = vpop.f32.mrf.mxu0
    %677 = vdwg.mxu0
    %678 = vmatpush.bf16.msra.mxu0 %v532
    %679 = vmatpush.bf16.msra.mxu0 %v531
    %680 = vmatpush.bf16.msra.mxu0 %v530
    %681 = vmatpush.bf16.msra.mxu0 %v529
    %682 = vmatpush.bf16.msra.mxu0 %v528
    %683 = vmatpush.bf16.msra.mxu0 %v527
    %684 = vmatpush.bf16.msra.mxu0 %v526
    %685 = vmatpush.bf16.msra.mxu0 %v525
    %686 = vmatmul.bf16.gmra.mxu0 %v94
    %v687 = vpop.f32.mrf.mxu0
    %v688 = vadd.f32 %v675, %v687
    %v689 = vpop.f32.mrf.mxu0
    %690 = vdwg.mxu0
    %691 = vmatpush.bf16.msra.mxu0 %v540
    %692 = vmatpush.bf16.msra.mxu0 %v539
    %693 = vmatpush.bf16.msra.mxu0 %v538
    %694 = vmatpush.bf16.msra.mxu0 %v537
    %695 = vmatpush.bf16.msra.mxu0 %v536
    %696 = vmatpush.bf16.msra.mxu0 %v535
    %697 = vmatpush.bf16.msra.mxu0 %v534
    %698 = vmatpush.bf16.msra.mxu0 %v533
    %699 = vmatmul.bf16.gmra.mxu0 %v95
    %v700 = vpop.f32.mrf.mxu0
    %v701 = vadd.f32 %v688, %v700
    %v702 = vpop.f32.mrf.mxu0
    %703 = vdwg.mxu0
    %704 = vmatpush.bf16.msra.mxu0 %v548
    %705 = vmatpush.bf16.msra.mxu0 %v547
    %706 = vmatpush.bf16.msra.mxu0 %v546
    %707 = vmatpush.bf16.msra.mxu0 %v545
    %708 = vmatpush.bf16.msra.mxu0 %v544
    %709 = vmatpush.bf16.msra.mxu0 %v543
    %710 = vmatpush.bf16.msra.mxu0 %v542
    %711 = vmatpush.bf16.msra.mxu0 %v541
    %712 = vmatmul.bf16.gmra.mxu0 %v96
    %v713 = vpop.f32.mrf.mxu0
    %v714 = vadd.f32 %v701, %v713
    %v715 = vpop.f32.mrf.mxu0
    %716 = vdwg.mxu0
    %v717 = vmax.f32 %v714, 0.0
    %v718 = vpack.c.bf16 %v717, %v717
    %v719 = vld [vmem:[#allocation7] sm:$0xf]
    %v720 = vld [vmem:[#allocation7 + $0x4] sm:$0xf]
    %v721 = vld [vmem:[#allocation7 + $0x8] sm:$0xf]
    %v722 = vld [vmem:[#allocation7 + $0xc] sm:$0xf]
    %v723 = vld [vmem:[#allocation7 + $0x10] sm:$0xf]
    %v724 = vld [vmem:[#allocation7 + $0x14] sm:$0xf]
    %v725 = vld [vmem:[#allocation7 + $0x18] sm:$0xf]
    %v726 = vld [vmem:[#allocation7 + $0x1c] sm:$0xf]
    %v727 = vld [vmem:[#allocation7 + $0x20] sm:$0xf]
    %v728 = vld [vmem:[#allocation7 + $0x24] sm:$0xf]
    %v729 = vld [vmem:[#allocation7 + $0x28] sm:$0xf]
    %v730 = vld [vmem:[#allocation7 + $0x2c] sm:$0xf]
    %v731 = vld [vmem:[#allocation7 + $0x30] sm:$0xf]
    %v732 = vld [vmem:[#allocation7 + $0x34] sm:$0xf]
    %v733 = vld [vmem:[#allocation7 + $0x38] sm:$0xf]
    %v734 = vld [vmem:[#allocation7 + $0x3c] sm:$0xf]
    %v735 = vld [vmem:[%s4] sm:$0x1]
    %v737 = vperm.slane %v735, 0
    %v755 = vunpack.c.l.b16 %v719
    %v756 = vunpack.c.l.b16 %v720
    %v757 = vunpack.c.l.b16 %v721
    %v758 = vunpack.c.l.b16 %v722
    %v759 = vunpack.c.l.b16 %v723
    %v760 = vunpack.c.l.b16 %v724
    %v761 = vunpack.c.l.b16 %v725
    %v762 = vunpack.c.l.b16 %v726
    %v763 = vunpack.c.l.b16 %v727
    %v764 = vunpack.c.l.b16 %v728
    %v765 = vunpack.c.l.b16 %v729
    %v766 = vunpack.c.l.b16 %v730
    %v767 = vunpack.c.l.b16 %v731
    %v768 = vunpack.c.l.b16 %v732
    %v769 = vunpack.c.l.b16 %v733
    %v770 = vunpack.c.l.b16 %v734
    %v771 = vpack.c.b16 %v756, %v755
    %v772 = vpack.c.b16 %v758, %v757
    %v773 = vpack.c.b16 %v760, %v759
    %v774 = vpack.c.b16 %v762, %v761
    %v775 = vpack.c.b16 %v764, %v763
    %v776 = vpack.c.b16 %v766, %v765
    %v777 = vpack.c.b16 %v768, %v767
    %v778 = vpack.c.b16 %v770, %v769
    %787 = vmatpush.bf16.msra.mxu0 %v778
    %788 = vmatpush.bf16.msra.mxu0 %v777
    %789 = vmatpush.bf16.msra.mxu0 %v776
    %790 = vmatpush.bf16.msra.mxu0 %v775
    %791 = vmatpush.bf16.msra.mxu0 %v774
    %792 = vmatpush.bf16.msra.mxu0 %v773
    %793 = vmatpush.bf16.msra.mxu0 %v772
    %794 = vmatpush.bf16.msra.mxu0 %v771
    %795 = vmatmul.bf16.gmra.mxu0 %v718
    %v796 = vpop.f32.mrf.mxu0
    %v797 = vadd.f32 %v737, %v796
    %v798 = vpop.f32.mrf.mxu0
    %799 = vdwg.mxu0
    %v800 = vpack.c.bf16 %v797, %v797
    %801 = vst [vmem:[#allocation8] sm:$0x1] %v800
    // Predicated region
    $region34: #{tpu_custom_call.1} parent=1 // pred_check
      _
    $region35: #{tpu_custom_call.1} parent=1 // pred_check_branch
      %803 = sbr.rel (0) target = $region37
    $region36: #{tpu_custom_call.1} parent=1 // pred_region
      %805 = vsyncadd [#allocation4], 0
      %s807 = sshll.u32 [#allocation8], 4
      %s808 = int_to_ptr.vmem [resolvable:$true] %s807
      %s809 = sshll.u32 %s5, 4
      %s810 = int_to_ptr.hbm [resolvable:$true] %s809
      %812 = dma.vmem_to_hbm [thread:$0]  %s808, 16, %s810, [#allocation4]
    $region37: #{tpu_custom_call.1} parent=1 // pred_fallthru
      _
    // Predicated region
    $region38: #{tpu_custom_call.1} parent=1 // pred_check
      _
    $region39: #{tpu_custom_call.1} parent=1 // pred_check_branch
      %814 = sbr.rel (0) target = $region41
    $region40: #{tpu_custom_call.1} parent=1 // pred_region
      %816 = dma.done [#allocation4], 16
    $region41: #{tpu_custom_call.1} parent=1 // pred_fallthru
      _
    %817 = vsyncpa [#allocation3], 1
    %818 = vsyncpa [#allocation6], 1
    %819 = vsyncpa [#allocation4], 1

</llo_original>
